<compile_context>
chip_gen: v7x
topology: tpu7x:2x2x1
jax: 0.10.0
libtpu: 0.0.40
codegen_flags: <defaults>
</compile_context>

<pallas_src>
import functools

import jax
import jax.numpy as jnp
from jax import lax
from jax.experimental import pallas as pl
from jax.experimental.pallas import tpu as pltpu


def _branch_kernel(x_ref, w_ref, b_ref, o_ref, acc_ref, *,
                   inv_hw, hw, ts, mask_tail):
    # x_ref:   (tn, C, ts)   native dtype (spatial tile of the input)
    # w_ref:   (C, nc_pad)   pre-transposed, lane-padded weight
    # b_ref:   (1, nc_pad)   float32 bias (lane-padded)
    # o_ref:   (tn, nc_pad)  output tile (resident across the spatial axis)
    # acc_ref: (tn, C)       float32 spatial-sum accumulator (scratch)
    j = pl.program_id(1)

    @pl.when(j == 0)
    def _():
        acc_ref[...] = jnp.zeros_like(acc_ref)

    xv = x_ref[...]
    if mask_tail:
        # Spatial extent does not divide the tile: zero out the out-of-range
        # lanes of the (only ragged) last tile.  VPU select; free when
        # memory-bound.  Traced in only when HW % ts != 0.
        lane = lax.broadcasted_iota(jnp.int32, xv.shape, dimension=2)
        xv = jnp.where(j * ts + lane < hw, xv, 0)

    # Partial sum over this spatial tile, accumulated in f32 without
    # materializing an f32 copy of the x tile.
    acc_ref[...] += jnp.sum(xv, axis=-1, dtype=jnp.float32)

    @pl.when(j == pl.num_programs(1) - 1)
    def _():
        pooled = acc_ref[...] * inv_hw                                 # (tn, C) mean
        out = jnp.dot(pooled, w_ref[...].astype(jnp.float32),
                      preferred_element_type=jnp.float32)              # MXU
        o_ref[...] = (out + b_ref[...]).astype(o_ref.dtype)


def branch_forward(x_nchw, weight, bias, *,
                   max_spatial_tile=512, vmem_budget_bytes=12 * 1024 * 1024):
    """x_nchw: (N, C, H, W); weight: (num_classes, C); bias: (num_classes,)"""
    N, C, H, W = x_nchw.shape
    num_classes = weight.shape[0]
    HW = H * W
    itemsize = jnp.dtype(x_nchw.dtype).itemsize

    # Lane-dense output: pad num_classes up to a multiple of 128.
    nc_pad = 128 * pl.cdiv(num_classes, 128)

    # Spatial (reduction) tile: whole extent if it fits the budget with at
    # least 8 batch rows, otherwise a lane-aligned (multiple-of-128) tile.
    max_ts = max(128, vmem_budget_bytes // (2 * 8 * C * itemsize))
    ts = HW if HW <= max_ts else min(max_spatial_tile, (max_ts // 128) * 128)

    # Batch tile: biggest multiple of 8 whose double-buffered x tile fits the
    # budget (sized for v7x's smaller VMEM; larger chips just pipeline more).
    tn = max(1, vmem_budget_bytes // (2 * C * ts * itemsize))
    if tn >= N:
        tn = N                               # full-dim block, (8,128)-exempt
    else:
        tn = min(256, max(8, (tn // 8) * 8))

    mask_tail = (HW % ts) != 0
    grid = (pl.cdiv(N, tn), pl.cdiv(HW, ts))

    # Layout plumbing in the wrapper: the (N, C, HW) view is a free reshape;
    # only the tiny weight/bias get padded — x is never copied in HBM.
    x_flat = x_nchw.reshape(N, C, HW)
    w_t = jnp.pad(weight.T, ((0, 0), (0, nc_pad - num_classes)))     # (C, nc_pad)
    b_p = jnp.pad(bias.astype(jnp.float32),
                  (0, nc_pad - num_classes)).reshape(1, nc_pad)

    kernel = functools.partial(_branch_kernel, inv_hw=1.0 / float(HW),
                               hw=HW, ts=ts, mask_tail=mask_tail)

    cost = pl.CostEstimate(
        flops=N * C * HW + 2 * N * C * num_classes + N * C,
        transcendentals=0,
        bytes_accessed=(x_flat.size * itemsize
                        + w_t.size * jnp.dtype(w_t.dtype).itemsize
                        + b_p.size * 4
                        + N * nc_pad * itemsize),
    )

    out_padded = pl.pallas_call(
        kernel,
        out_shape=jax.ShapeDtypeStruct((N, nc_pad), x_nchw.dtype),
        grid_spec=pltpu.PrefetchScalarGridSpec(
            num_scalar_prefetch=0,
            grid=grid,                                  # (batch, spatial-reduction)
            in_specs=[
                pl.BlockSpec((tn, C, ts), lambda i, j: (i, 0, j)),
                pl.BlockSpec((C, nc_pad), lambda i, j: (0, 0)),   # VMEM-resident
                pl.BlockSpec((1, nc_pad), lambda i, j: (0, 0)),   # VMEM-resident
            ],
            out_specs=pl.BlockSpec((tn, nc_pad), lambda i, j: (i, 0)),
            scratch_shapes=[pltpu.VMEM((tn, C), jnp.float32)],
        ),
        compiler_params=pltpu.CompilerParams(
            dimension_semantics=("parallel", "arbitrary"),
            vmem_limit_bytes=32 * 1024 * 1024,
        ),
        cost_estimate=cost,
    )(x_flat, w_t, b_p)

    return out_padded[:, :num_classes]


def _reference(x_nchw, weight, bias):
    pooled = jnp.mean(x_nchw, axis=(2, 3))             # (N, C)
    return pooled @ weight.T + bias[None, :]


if __name__ == "__main__":
    key = jax.random.PRNGKey(0)
    N, C, H, W = 2, 4, 16, 16
    num_classes = 8

    k_x, k_w, k_b = jax.random.split(key, 3)
    x = jax.random.normal(k_x, (N, C, H, W), dtype=jnp.float32)
    # Deterministic "Linear" params (kaiming-uniform-like bound, synthetic).
    bound = 1.0 / jnp.sqrt(C)
    weight = jax.random.uniform(k_w, (num_classes, C), minval=-bound,
                                maxval=bound, dtype=jnp.float32)
    bias = jax.random.uniform(k_b, (num_classes,), minval=-bound,
                              maxval=bound, dtype=jnp.float32)

    out = branch_forward(x, weight, bias)
    jax.block_until_ready(out)

    ref = _reference(x, weight, bias)
    assert out.shape == (N, num_classes)
    assert jnp.allclose(out, ref, atol=1e-5, rtol=1e-5)

    print("KERNEL_OK")
</pallas_src>

<mosaic_0001>
module attributes {stable_mosaic.version = 11 : i64} {
  func.func @_branch_kernel(%arg0: i32, %arg1: i32, %arg2: memref<2x4x256xf32, #tpu.memory_space<vmem>>, %arg3: memref<4x128xf32, #tpu.memory_space<vmem>>, %arg4: memref<1x128xf32, #tpu.memory_space<vmem>>, %arg5: memref<2x128xf32, #tpu.memory_space<vmem>>, %arg6: memref<2x4xf32, #tpu.memory_space<vmem>>) attributes {dimension_semantics = [#tpu.dimension_semantics<parallel>, #tpu.dimension_semantics<arbitrary>], iteration_bounds = array<i64: 1, 1>, scalar_prefetch = 0 : i64, scratch_operands = 1 : i64, tpu.core_type = #tpu.core_type<tc>, window_params = [{transform_indices = @transform_0, window_bounds = array<i64: 2, 4, 256>}, {pipeline_mode = #tpu.pipeline_mode<synchronous>, transform_indices = @transform_1, window_bounds = array<i64: 4, 128>}, {pipeline_mode = #tpu.pipeline_mode<synchronous>, transform_indices = @transform_2, window_bounds = array<i64: 1, 128>}, {transform_indices = @transform_3, window_bounds = array<i64: 2, 128>}]} {
    %c0_i32 = arith.constant 0 : i32
    %0 = arith.cmpi eq, %arg1, %c0_i32 : i32
    %1 = arith.extui %0 : i1 to i32
    %c0_i32_0 = arith.constant 0 : i32
    %2 = arith.cmpi ne, %1, %c0_i32_0 : i32
    scf.if %2 {
      %cst_9 = arith.constant 0.000000e+00 : f32
      %11 = vector.broadcast %cst_9 : f32 to vector<2x4xf32>
      %c0_10 = arith.constant 0 : index
      %c0_11 = arith.constant 0 : index
      %12 = vector.load %arg6[%c0_10, %c0_11] : memref<2x4xf32, #tpu.memory_space<vmem>>, vector<2x4xf32>
      tpu.vector_store %arg6[%c0_10, %c0_11], %11 {strides = array<i32>} : memref<2x4xf32, #tpu.memory_space<vmem>>, vector<2x4xf32>,
    } else {
    }
    %c0 = arith.constant 0 : index
    %c0_1 = arith.constant 0 : index
    %c0_2 = arith.constant 0 : index
    %3 = vector.load %arg2[%c0, %c0_1, %c0_2] : memref<2x4x256xf32, #tpu.memory_space<vmem>>, vector<2x4x256xf32>
    %c0_3 = arith.constant 0 : index
    %c0_4 = arith.constant 0 : index
    %4 = vector.load %arg6[%c0_3, %c0_4] : memref<2x4xf32, #tpu.memory_space<vmem>>, vector<2x4xf32>
    %cst = arith.constant dense<0.000000e+00> : vector<2x4xf32>
    %5 = vector.multi_reduction <add>, %3, %cst [2] : vector<2x4x256xf32> to vector<2x4xf32>
    %6 = arith.addf %4, %5 : vector<2x4xf32>
    %c0_5 = arith.constant 0 : index
    %c0_6 = arith.constant 0 : index
    %7 = vector.load %arg6[%c0_5, %c0_6] : memref<2x4xf32, #tpu.memory_space<vmem>>, vector<2x4xf32>
    tpu.vector_store %arg6[%c0_5, %c0_6], %6 {strides = array<i32>} : memref<2x4xf32, #tpu.memory_space<vmem>>, vector<2x4xf32>,
    %c0_i32_7 = arith.constant 0 : i32
    %8 = arith.cmpi eq, %arg1, %c0_i32_7 : i32
    %9 = arith.extui %8 : i1 to i32
    %c0_i32_8 = arith.constant 0 : i32
    %10 = arith.cmpi ne, %9, %c0_i32_8 : i32
    scf.if %10 {
      %c0_9 = arith.constant 0 : index
      %c0_10 = arith.constant 0 : index
      %11 = vector.load %arg6[%c0_9, %c0_10] : memref<2x4xf32, #tpu.memory_space<vmem>>, vector<2x4xf32>
      %cst_11 = arith.constant 3.906250e-03 : f32
      %12 = vector.broadcast %cst_11 : f32 to vector<2x4xf32>
      %13 = arith.mulf %11, %12 : vector<2x4xf32>
      %c0_12 = arith.constant 0 : index
      %c0_13 = arith.constant 0 : index
      %14 = vector.load %arg3[%c0_12, %c0_13] : memref<4x128xf32, #tpu.memory_space<vmem>>, vector<4x128xf32>
      %cst_14 = arith.constant dense<0.000000e+00> : vector<2x128xf32>
      %15 = tpu.matmul %13, %14, %cst_14 {dimension_numbers = #tpu.dot_dimension_numbers<[1], [0], [0], [1], [0, 0, 1, 1], [], []>} : vector<2x4xf32>, vector<4x128xf32>, vector<2x128xf32> -> vector<2x128xf32>
      %c0_15 = arith.constant 0 : index
      %c0_16 = arith.constant 0 : index
      %16 = vector.load %arg4[%c0_15, %c0_16] : memref<1x128xf32, #tpu.memory_space<vmem>>, vector<1x128xf32>
      %17 = vector.broadcast %16 : vector<1x128xf32> to vector<2x128xf32>
      %18 = arith.addf %15, %17 : vector<2x128xf32>
      %c0_17 = arith.constant 0 : index
      %c0_18 = arith.constant 0 : index
      %19 = vector.load %arg5[%c0_17, %c0_18] : memref<2x128xf32, #tpu.memory_space<vmem>>, vector<2x128xf32>
      tpu.vector_store %arg5[%c0_17, %c0_18], %18 {strides = array<i32>} : memref<2x128xf32, #tpu.memory_space<vmem>>, vector<2x128xf32>,
    } else {
    }
    return
  }
  func.func @transform_0(%arg0: i32, %arg1: i32) -> (i32, i32, i32) {
    %c0_i32 = arith.constant 0 : i32
    %c0_i32_0 = arith.constant 0 : i32
    return %arg0, %c0_i32, %arg1 : i32, i32, i32
  }
  func.func @transform_1(%arg0: i32, %arg1: i32) -> (i32, i32) {
    %c0_i32 = arith.constant 0 : i32
    %c0_i32_0 = arith.constant 0 : i32
    %c0_i32_1 = arith.constant 0 : i32
    return %c0_i32, %c0_i32_0 : i32, i32
  }
  func.func @transform_2(%arg0: i32, %arg1: i32) -> (i32, i32) {
    %c0_i32 = arith.constant 0 : i32
    %c0_i32_0 = arith.constant 0 : i32
    %c0_i32_1 = arith.constant 0 : i32
    return %c0_i32, %c0_i32_0 : i32, i32
  }
  func.func @transform_3(%arg0: i32, %arg1: i32) -> (i32, i32) {
    %c0_i32 = arith.constant 0 : i32
    %c0_i32_0 = arith.constant 0 : i32
    return %arg0, %c0_i32 : i32, i32
  }
}

</mosaic_0001>

<llo_original>
// kernel: tpu_custom_call.1
$region0: #{tpu_custom_call.1}
  #allocation0 [shape = 'u32[]', space=smem, size = 0x4, offset = 0x4, fixed_abs, tag = 'smem constant byte address 0x4 - core index']
  #allocation1 [shape = 'u32[144,128]{1,0:T(1,128)}', space=vmem, size = 0x12000, scoped, tag = 'internal scratch']
  #allocation2 [shape = 'f32[2,4]{1,0:T(2,128)}', space=vmem, size = 0x400, scoped, tag = 'scratch operand']
  %s0 = inlined_call_operand.hbm [shape: f32[2,4,256], index: 0, kind: input, shape index: {}]
  %s1 = inlined_call_operand.hbm [shape: f32[4,128], index: 1, kind: input, shape index: {}]
  %s2 = inlined_call_operand.vmem [shape: f32[1,128], index: 2, kind: input, shape index: {}]
  %s3 = inlined_call_operand.hbm [shape: f32[2,128], index: 3, kind: output, shape index: {}]
  %s4 = sld [smem:[#allocation0]]
  $region38: #{tpu_custom_call.1} parent=0
    _
  %s6 = ssub.s32 1, %s4
  %s7 = scalar_select 0, %s6, %s4
  $region1: #{tpu_custom_call.1} parent=0
    #allocation3 [shape = 'u8[8192]{0}', space=vmem, size = 0x2000, scoped, tag = 'input window, operand 0, single buffered']
    #allocation4 [shape = 's32[1]{0}', space=sflag, size = 0x4, scoped, tag = 'scoped memory for tpu_custom_call.1']
    #allocation5 [shape = 's32[1]{0}', space=sflag, size = 0x4, scoped, tag = 'scoped memory for tpu_custom_call.1']
    #allocation6 [shape = 'u8[2048]{0}', space=vmem, size = 0x800, scoped, tag = 'input window, operand 1, single buffered']
    #allocation7 [shape = 's32[1]{0}', space=sflag, size = 0x4, scoped, tag = 'scoped memory for tpu_custom_call.1']
    #allocation8 [shape = 'u8[1024]{0}', space=vmem, size = 0x400, scoped, tag = 'output window, operand 0, single buffered']
    %8 = vsyncpa [#allocation4], 0
    %9 = vsyncpa [#allocation7], 0
    %10 = vsyncpa [#allocation5], 0
    // Predicated region
    $region2: #{tpu_custom_call.1} parent=1 // pred_check
      _
    $region3: #{tpu_custom_call.1} parent=1 // pred_check_branch
      %12 = sbr.rel (0) target = $region5
    $region4: #{tpu_custom_call.1} parent=1 // pred_region
      %s14 = ssub.s32 256, 256
      %15 = vsyncadd [#allocation4], %s14
      %s16 = sshll.u32 [#allocation3], 4
      %s17 = int_to_ptr.vmem [resolvable:$true] %s16
      %22 = dma.hbm_to_vmem [thread:$0]  %s0, 256, %s17, [#allocation4], 128, 128, 8
    $region5: #{tpu_custom_call.1} parent=1 // pred_fallthru
      _
    // Predicated region
    $region6: #{tpu_custom_call.1} parent=1 // pred_check
      _
    $region7: #{tpu_custom_call.1} parent=1 // pred_check_branch
      %24 = sbr.rel (0) target = $region9
    $region8: #{tpu_custom_call.1} parent=1 // pred_region
      %s26 = ssub.s32 64, 64
      %27 = vsyncadd [#allocation7], %s26
      %s29 = sshll.u32 [#allocation6], 4
      %s30 = int_to_ptr.vmem [resolvable:$true] %s29
      %32 = dma.hbm_to_vmem [thread:$0]  %s1, 64, %s30, [#allocation7]
    $region9: #{tpu_custom_call.1} parent=1 // pred_fallthru
      _
    // Predicated region
    $region10: #{tpu_custom_call.1} parent=1 // pred_check
      _
    $region11: #{tpu_custom_call.1} parent=1 // pred_check_branch
      %34 = sbr.rel (0) target = $region13
    $region12: #{tpu_custom_call.1} parent=1 // pred_region
      _
    $region13: #{tpu_custom_call.1} parent=1 // pred_fallthru
      _
    // Predicated region
    $region14: #{tpu_custom_call.1} parent=1 // pred_check
      _
    $region15: #{tpu_custom_call.1} parent=1 // pred_check_branch
      %36 = sbr.rel (0) target = $region17
    $region16: #{tpu_custom_call.1} parent=1 // pred_region
      %37 = dma.done [#allocation4], 256
    $region17: #{tpu_custom_call.1} parent=1 // pred_fallthru
      _
    // Predicated region
    $region18: #{tpu_custom_call.1} parent=1 // pred_check
      _
    $region19: #{tpu_custom_call.1} parent=1 // pred_check_branch
      %39 = sbr.rel (0) target = $region21
    $region20: #{tpu_custom_call.1} parent=1 // pred_region
      %40 = dma.done [#allocation7], 64
    $region21: #{tpu_custom_call.1} parent=1 // pred_fallthru
      _
    %p41 = scmp.eq.s32.totalorder 0, 0
    // Predicated region
    $region22: #{tpu_custom_call.1} parent=1 // pred_check
      %p42 = pneg %p41
    $region23: #{tpu_custom_call.1} parent=1 // pred_check_branch
      %44 = sbr.rel (%p42) target = $region25
    $region24: #{tpu_custom_call.1} parent=1 // pred_region
      %vm45 = vcmask 25600
      %46 = vst.msk [vmem:[#allocation2] sm:$0x3] %vm45, 0.0
    $region25: #{tpu_custom_call.1} parent=1 // pred_fallthru
      _
    %v47 = vld [vmem:[#allocation3] sm:$0xff]
    %v48 = vld [vmem:[#allocation3 + $0x8] sm:$0xff]
    %v49 = vld [vmem:[#allocation2] sm:$0x3]
    %v52 = vcombine.high %v47, %v47
    %v53 = vcombine.high %v48, %v48
    %vm56 = vcmask 1043456
    %v57 = vsel %vm56, %v47, 0.0
    %v58 = vsel %vm56, %v52, 0.0
    %v59 = vadd.f32 %v57, %v58
    %60 = vadd.xlane.f32.xlu0 %v59
    %v61 = vpop.xlane.xlu0 %60
    %v62 = vsel %vm56, %v48, 0.0
    %v63 = vsel %vm56, %v53, 0.0
    %v64 = vadd.f32 %v62, %v63
    %65 = vadd.xlane.f32.xlu0 %v64
    %v66 = vpop.xlane.xlu0 %65
    %v69 = vlaneseq
    %v70 = vand.u32 %v69, 127
    %v71 = vlaneseq
    %v72 = vshrl.u32 %v71, 7
    %v73 = vsub.s32 %v70, %v72
    %v74 = vrot.slane %v61, %v73
    %v75 = vlaneseq
    %v76 = vshrl.u32 %v75, 7
    %v77 = vsub.s32 %v70, %v76
    %v78 = vrot.slane %v66, %v77
    %vm79 = vcmask 1041409
    %v80 = vsel %vm79, %v78, %v74
    %v82 = vadd.f32 %v49, %v80
    %vm83 = vcmask 25600
    %84 = vst.msk [vmem:[#allocation2] sm:$0x3] %vm83, %v82
    // Predicated region
    $region26: #{tpu_custom_call.1} parent=1 // pred_check
      %p85 = pneg %p41
    $region27: #{tpu_custom_call.1} parent=1 // pred_check_branch
      %87 = sbr.rel (%p85) target = $region29
    $region28: #{tpu_custom_call.1} parent=1 // pred_region
      %v88 = vld [vmem:[#allocation2] sm:$0x3]
      %v89 = vmul.f32 %v88, 0.00390625
      %v90 = vld [vmem:[#allocation6] sm:$0xf]
      %v91 = vld [vmem:[%s2] sm:$0x1]
      %v93 = vlaneseq
      %v94 = vshrl.u32 %v93, 7
      %v95 = vsub.s32 0, %v94
      %v96 = vrot.slane %v91, %v95
      %vm98 = vcmask 31744
      %v100 = vsel %vm98, %v89, 0
      %v103 = vsel %vm56, %v90, 0
      %105 = vmatprep.subr.mxu0 0.0
      %106 = vmatpush1.msra.mxu0 %v103
      %107 = vmatprep.subr.mxu0 0.0
      %108 = vmatpush1.msra.mxu0 0.0
      %109 = vmatprep.subr.mxu0 0.0
      %110 = vmatpush1.msra.mxu0 0.0
      %111 = vmatprep.subr.mxu0 0.0
      %112 = vmatpush1.msra.mxu0 0.0
      %113 = vmatprep.subr.mxu0 0.0
      %114 = vmatpush1.msra.mxu0 0.0
      %115 = vmatprep.subr.mxu0 0.0
      %116 = vmatpush1.msra.mxu0 0.0
      %117 = vmatprep.subr.mxu0 0.0
      %118 = vmatpush1.msra.mxu0 0.0
      %119 = vmatprep.subr.mxu0 0.0
      %120 = vmatpush1.msra.mxu0 0.0
      %121 = vmatprep.subr.mxu0 0.0
      %122 = vmatpush1.msra.mxu0 0.0
      %123 = vmatprep.subr.mxu0 0.0
      %124 = vmatpush1.msra.mxu0 0.0
      %125 = vmatprep.subr.mxu0 0.0
      %126 = vmatpush1.msra.mxu0 0.0
      %127 = vmatprep.subr.mxu0 0.0
      %128 = vmatpush1.msra.mxu0 0.0
      %129 = vmatprep.subr.mxu0 0.0
      %130 = vmatpush1.msra.mxu0 0.0
      %131 = vmatprep.subr.mxu0 0.0
      %132 = vmatpush1.msra.mxu0 0.0
      %133 = vmatprep.subr.mxu0 0.0
      %134 = vmatpush1.msra.mxu0 0.0
      %135 = vmatprep.subr.mxu0 0.0
      %136 = vmatpush1.msra.mxu0 0.0
      %137 = vmatprep.subr.mxu0 0.0
      %138 = vmatpush1.msra.mxu0 0.0
      %139 = vmatprep.subr.mxu0 0.0
      %140 = vmatpush1.msra.mxu0 0.0
      %141 = vmatprep.subr.mxu0 0.0
      %142 = vmatpush1.msra.mxu0 0.0
      %143 = vmatprep.subr.mxu0 0.0
      %144 = vmatpush1.msra.mxu0 0.0
      %145 = vmatprep.subr.mxu0 0.0
      %146 = vmatpush1.msra.mxu0 0.0
      %147 = vmatprep.subr.mxu0 0.0
      %148 = vmatpush1.msra.mxu0 0.0
      %149 = vmatprep.subr.mxu0 0.0
      %150 = vmatpush1.msra.mxu0 0.0
      %151 = vmatprep.subr.mxu0 0.0
      %152 = vmatpush1.msra.mxu0 0.0
      %153 = vmatprep.subr.mxu0 0.0
      %154 = vmatpush1.msra.mxu0 0.0
      %155 = vmatprep.subr.mxu0 0.0
      %156 = vmatpush1.msra.mxu0 0.0
      %157 = vmatprep.subr.mxu0 0.0
      %158 = vmatpush1.msra.mxu0 0.0
      %159 = vmatprep.subr.mxu0 0.0
      %160 = vmatpush1.msra.mxu0 0.0
      %161 = vmatprep.subr.mxu0 0.0
      %162 = vmatpush1.msra.mxu0 0.0
      %163 = vmatprep.subr.mxu0 0.0
      %164 = vmatpush1.msra.mxu0 0.0
      %165 = vmatprep.subr.mxu0 0.0
      %166 = vmatpush1.msra.mxu0 0.0
      %167 = vmatprep.subr.mxu0 0.0
      %168 = vmatpush1.msra.mxu0 0.0
      %169 = vmatprep.mubr.f32.mxu0 0.0
      %170 = vmatmul.mubr.f32.gmra.mrb[0].mxu0 %v100
      %v171 = vpop.f32.mrb[0].mxu0
      %v172 = vadd.f32 %v96, %v171
      %v173 = vpop.f32.mrb[0].mxu0
      %174 = vdwg.mxu0
      %175 = vst [vmem:[#allocation8] sm:$0x3] %v172
    $region29: #{tpu_custom_call.1} parent=1 // pred_fallthru
      _
    // Predicated region
    $region30: #{tpu_custom_call.1} parent=1 // pred_check
      _
    $region31: #{tpu_custom_call.1} parent=1 // pred_check_branch
      %177 = sbr.rel (0) target = $region33
    $region32: #{tpu_custom_call.1} parent=1 // pred_region
      %s179 = ssub.s32 32, 32
      %180 = vsyncadd [#allocation5], %s179
      %s182 = sshll.u32 [#allocation8], 4
      %s183 = int_to_ptr.vmem [resolvable:$true] %s182
      %185 = dma.vmem_to_hbm [thread:$0]  %s183, 32, %s3, [#allocation5]
    $region33: #{tpu_custom_call.1} parent=1 // pred_fallthru
      _
    // Predicated region
    $region34: #{tpu_custom_call.1} parent=1 // pred_check
      _
    $region35: #{tpu_custom_call.1} parent=1 // pred_check_branch
      %187 = sbr.rel (0) target = $region37
    $region36: #{tpu_custom_call.1} parent=1 // pred_region
      %188 = dma.done [#allocation5], 32
    $region37: #{tpu_custom_call.1} parent=1 // pred_fallthru
      _
    %189 = vsyncpa [#allocation4], 1
    %190 = vsyncpa [#allocation7], 1
    %191 = vsyncpa [#allocation5], 1

</llo_original>
